<compile_context>
chip_gen: v5e
topology: v5e:2x2
jax: 0.10.0
libtpu: 0.0.40
codegen_flags: <defaults>
</compile_context>

<pallas_src>
import functools

import jax
import jax.numpy as jnp
from jax.experimental import pallas as pl
from jax.experimental.pallas import tpu as pltpu


def frelu_kernel(x_ref, w_ref, shift_ref, o_ref, *, H, W):
    # x_ref:     VMEM (1, Cb, H*W)  input slab (lane axis = flattened spatial)
    # w_ref:     VMEM (Cb, 9)       BN-scale-folded 3x3 depthwise weights (f32)
    # shift_ref: VMEM (Cb, 1)       folded BN shift (f32)
    # o_ref:     VMEM (1, Cb, H*W)  output slab
    HW = H * W
    xf = x_ref[0].astype(jnp.float32)                 # (Cb, HW)
    cb = xf.shape[0]
    w = w_ref[...]                                    # (Cb, 9)
    shift = shift_ref[...]                            # (Cb, 1)

    # Flat spatial index / column coordinate for zero-padding edge masks.
    p = jax.lax.broadcasted_iota(jnp.int32, (cb, HW), 1)
    col = p % W
    row_ok_up = p >= W                                # h - 1 >= 0
    row_ok_dn = p < HW - W                            # h + 1 <= H-1
    col_ok_lf = col >= 1                              # w - 1 >= 0
    col_ok_rt = col <= W - 2                          # w + 1 <= W-1

    # Center tap: no shift, no mask.
    acc = w[:, 4:5] * xf

    for dy in (-1, 0, 1):
        for dx in (-1, 0, 1):
            if dy == 0 and dx == 0:
                continue
            t = (dy + 1) * 3 + (dx + 1)
            # shifted[p] == x_flat[p + dy*W + dx]; wrapped lanes are masked off.
            shifted = pltpu.roll(xf, shift=(-(dy * W + dx)) % HW, axis=1)
            valid = None
            if dy == -1:
                valid = row_ok_up
            elif dy == 1:
                valid = row_ok_dn
            if dx == -1:
                valid = col_ok_lf if valid is None else (valid & col_ok_lf)
            elif dx == 1:
                valid = col_ok_rt if valid is None else (valid & col_ok_rt)
            shifted = jnp.where(valid, shifted, 0.0)
            acc = acc + w[:, t:t + 1] * shifted

    bn = acc + shift                                  # folded BatchNorm (eval)
    o_ref[0] = jnp.maximum(xf, bn).astype(o_ref.dtype)


def _choose_channel_block(C, HW, target_bytes=1 << 20):
    """Largest Cb that divides C, is 8-aligned (or == C), and keeps an f32
    (Cb, H*W) slab under target_bytes (safe within v5e's 16 MiB scoped VMEM
    and v7x's 64 MiB physical VMEM, with double-buffered in/out blocks)."""
    legal = [cb for cb in range(1, C + 1)
             if C % cb == 0 and (cb % 8 == 0 or cb == C)]
    fitting = [cb for cb in legal if cb * HW * 4 <= target_bytes]
    return max(fitting) if fitting else min(legal)


def frelu_pallas(x, w_dw, gamma, beta, running_mean, running_var, eps=1e-5):
    """x: (N, C, H, W); w_dw: (C, 1, 3, 3) depthwise conv weight."""
    N, C, H, W = x.shape
    HW = H * W

    scale = (gamma / jnp.sqrt(running_var + eps)).astype(jnp.float32)   # (C,)
    shift = (beta - running_mean * scale).astype(jnp.float32)           # (C,)
    # Fold BN scale into the depthwise weights (per-channel => exact).
    w9 = w_dw.reshape(C, 9).astype(jnp.float32) * scale[:, None]

    cb = _choose_channel_block(C, HW)
    x_flat = x.reshape(N, C, HW)   # free reshape: NCHW is contiguous in (H, W)

    out_flat = pl.pallas_call(
        functools.partial(frelu_kernel, H=H, W=W),
        out_shape=jax.ShapeDtypeStruct((N, C, HW), x.dtype),
        grid_spec=pltpu.PrefetchScalarGridSpec(
            num_scalar_prefetch=0,
            grid=(N, C // cb),
            in_specs=[
                pl.BlockSpec((1, cb, HW), lambda n, c: (n, c, 0)),
                pl.BlockSpec((cb, 9), lambda n, c: (c, 0)),
                pl.BlockSpec((cb, 1), lambda n, c: (c, 0)),
            ],
            out_specs=pl.BlockSpec((1, cb, HW), lambda n, c: (n, c, 0)),
        ),
        compiler_params=pltpu.CompilerParams(
            dimension_semantics=("parallel", "parallel"),
            vmem_limit_bytes=32 * 1024 * 1024,
        ),
    )(x_flat, w9, shift.reshape(C, 1))
    return out_flat.reshape(N, C, H, W)


def frelu_reference(x, w_dw, gamma, beta, running_mean, running_var, eps=1e-5):
    """Pure-JAX reference (depthwise conv + eval-mode BN + max)."""
    C = x.shape[1]
    conv = jax.lax.conv_general_dilated(
        x, w_dw,
        window_strides=(1, 1),
        padding=((1, 1), (1, 1)),
        dimension_numbers=("NCHW", "OIHW", "NCHW"),
        feature_group_count=C,
    )
    scale = (gamma / jnp.sqrt(running_var + eps)).reshape(1, C, 1, 1)
    shift = (beta - running_mean * gamma / jnp.sqrt(running_var + eps)).reshape(1, C, 1, 1)
    bn = conv * scale + shift
    return jnp.maximum(x, bn)


if __name__ == "__main__":
    key = jax.random.PRNGKey(0)
    k_x, k_w, k_g, k_b, k_m, k_v = jax.random.split(key, 6)

    N, C, H, W = 2, 4, 16, 16

    x = jax.random.normal(k_x, (N, C, H, W), dtype=jnp.float32)
    # Depthwise conv weight: Conv2d(C, C, 3, groups=C, bias=False) -> (C, 1, 3, 3)
    w_dw = 0.1 * jax.random.normal(k_w, (C, 1, 3, 3), dtype=jnp.float32)
    # BatchNorm2d(C) parameters / running stats (deterministic, non-trivial).
    gamma = 1.0 + 0.1 * jax.random.normal(k_g, (C,), dtype=jnp.float32)
    beta = 0.1 * jax.random.normal(k_b, (C,), dtype=jnp.float32)
    running_mean = 0.1 * jax.random.normal(k_m, (C,), dtype=jnp.float32)
    running_var = 1.0 + 0.1 * jax.random.uniform(k_v, (C,), dtype=jnp.float32)

    out = frelu_pallas(x, w_dw, gamma, beta, running_mean, running_var)
    out = jax.block_until_ready(out)

    ref = frelu_reference(x, w_dw, gamma, beta, running_mean, running_var)
    ref = jax.block_until_ready(ref)

    assert out.shape == (N, C, H, W)
    assert jnp.allclose(out, ref, atol=1e-4, rtol=1e-4), "mismatch vs reference"

    print("KERNEL_OK")
</pallas_src>

<mosaic_0001>
module attributes {stable_mosaic.version = 11 : i64} {
  func.func @frelu_kernel(%arg0: i32, %arg1: i32, %arg2: memref<1x4x256xf32, #tpu.memory_space<vmem>>, %arg3: memref<4x9xf32, #tpu.memory_space<vmem>>, %arg4: memref<4x1xf32, #tpu.memory_space<vmem>>, %arg5: memref<1x4x256xf32, #tpu.memory_space<vmem>>) attributes {dimension_semantics = [#tpu.dimension_semantics<parallel>, #tpu.dimension_semantics<parallel>], iteration_bounds = array<i64: 2, 1>, scalar_prefetch = 0 : i64, scratch_operands = 0 : i64, tpu.core_type = #tpu.core_type<tc>, window_params = [{transform_indices = @transform_0, window_bounds = array<i64: 1, 4, 256>}, {transform_indices = @transform_1, window_bounds = array<i64: 4, 9>}, {transform_indices = @transform_2, window_bounds = array<i64: 4, 1>}, {transform_indices = @transform_3, window_bounds = array<i64: 1, 4, 256>}]} {
    %c0 = arith.constant 0 : index
    %c0_0 = arith.constant 0 : index
    %c0_1 = arith.constant 0 : index
    %0 = vector.load %arg2[%c0, %c0_0, %c0_1] : memref<1x4x256xf32, #tpu.memory_space<vmem>>, vector<1x4x256xf32>
    %1 = vector.shape_cast %0 : vector<1x4x256xf32> to vector<4x256xf32>
    %c0_2 = arith.constant 0 : index
    %c0_3 = arith.constant 0 : index
    %2 = vector.load %arg3[%c0_2, %c0_3] : memref<4x9xf32, #tpu.memory_space<vmem>>, vector<4x9xf32>
    %c0_4 = arith.constant 0 : index
    %c0_5 = arith.constant 0 : index
    %3 = vector.load %arg4[%c0_4, %c0_5] : memref<4x1xf32, #tpu.memory_space<vmem>>, vector<4x1xf32>
    %4 = tpu.iota {dimensions = array<i32: 1>} : vector<4x256xi32>
    %c16_i32 = arith.constant 16 : i32
    %c0_i32 = arith.constant 0 : i32
    %5 = arith.cmpi eq, %c16_i32, %c0_i32 : i32
    %c1_i32 = arith.constant 1 : i32
    %6 = arith.select %5, %c1_i32, %c16_i32 : i32
    %7 = vector.broadcast %6 : i32 to vector<4x256xi32>
    %8 = arith.remsi %4, %7 : vector<4x256xi32>
    %c0_i32_6 = arith.constant 0 : i32
    %9 = vector.broadcast %c0_i32_6 : i32 to vector<4x256xi32>
    %10 = arith.cmpi ne, %8, %9 : vector<4x256xi32>
    %c0_i32_7 = arith.constant 0 : i32
    %11 = vector.broadcast %c0_i32_7 : i32 to vector<4x256xi32>
    %12 = arith.cmpi slt, %8, %11 : vector<4x256xi32>
    %c0_i32_8 = arith.constant 0 : i32
    %13 = arith.cmpi slt, %6, %c0_i32_8 : i32
    %14 = vector.broadcast %13 : i1 to vector<4x256xi1>
    %15 = vector.broadcast %14 : vector<4x256xi1> to vector<4x256xi1>
    %16 = arith.xori %12, %15 : vector<4x256xi1>
    %17 = arith.andi %16, %10 : vector<4x256xi1>
    %18 = vector.broadcast %6 : i32 to vector<4x256xi32>
    %19 = arith.addi %8, %18 : vector<4x256xi32>
    %20 = arith.select %17, %19, %8 : vector<4x256xi1>, vector<4x256xi32>
    %c16_i32_9 = arith.constant 16 : i32
    %21 = vector.broadcast %c16_i32_9 : i32 to vector<4x256xi32>
    %22 = arith.cmpi sge, %4, %21 : vector<4x256xi32>
    %c240_i32 = arith.constant 240 : i32
    %23 = vector.broadcast %c240_i32 : i32 to vector<4x256xi32>
    %24 = arith.cmpi slt, %4, %23 : vector<4x256xi32>
    %c1_i32_10 = arith.constant 1 : i32
    %25 = vector.broadcast %c1_i32_10 : i32 to vector<4x256xi32>
    %26 = arith.cmpi sge, %20, %25 : vector<4x256xi32>
    %c14_i32 = arith.constant 14 : i32
    %27 = vector.broadcast %c14_i32 : i32 to vector<4x256xi32>
    %28 = arith.cmpi sle, %20, %27 : vector<4x256xi32>
    %29 = vector.extract_strided_slice %2 {offsets = [0, 4], sizes = [4, 1], strides = [1, 1]} : vector<4x9xf32> to vector<4x1xf32>
    %30 = vector.broadcast %29 : vector<4x1xf32> to vector<4x256xf32>
    %31 = arith.mulf %30, %1 : vector<4x256xf32>
    %c17_i32 = arith.constant 17 : i32
    %32 = tpu.dynamic_rotate %1 by %c17_i32 dim 1 : vector<4x256xf32>, i32 -> vector<4x256xf32>
    %33 = arith.andi %22, %26 : vector<4x256xi1>
    %cst = arith.constant 0.000000e+00 : f32
    %34 = vector.broadcast %cst : f32 to vector<4x256xf32>
    %35 = arith.select %33, %32, %34 : vector<4x256xi1>, vector<4x256xf32>
    %36 = vector.extract_strided_slice %2 {offsets = [0, 0], sizes = [4, 1], strides = [1, 1]} : vector<4x9xf32> to vector<4x1xf32>
    %37 = vector.broadcast %36 : vector<4x1xf32> to vector<4x256xf32>
    %38 = arith.mulf %37, %35 : vector<4x256xf32>
    %39 = arith.addf %31, %38 : vector<4x256xf32>
    %c16_i32_11 = arith.constant 16 : i32
    %40 = tpu.dynamic_rotate %1 by %c16_i32_11 dim 1 : vector<4x256xf32>, i32 -> vector<4x256xf32>
    %cst_12 = arith.constant 0.000000e+00 : f32
    %41 = vector.broadcast %cst_12 : f32 to vector<4x256xf32>
    %42 = arith.select %22, %40, %41 : vector<4x256xi1>, vector<4x256xf32>
    %43 = vector.extract_strided_slice %2 {offsets = [0, 1], sizes = [4, 1], strides = [1, 1]} : vector<4x9xf32> to vector<4x1xf32>
    %44 = vector.broadcast %43 : vector<4x1xf32> to vector<4x256xf32>
    %45 = arith.mulf %44, %42 : vector<4x256xf32>
    %46 = arith.addf %39, %45 : vector<4x256xf32>
    %c15_i32 = arith.constant 15 : i32
    %47 = tpu.dynamic_rotate %1 by %c15_i32 dim 1 : vector<4x256xf32>, i32 -> vector<4x256xf32>
    %48 = arith.andi %22, %28 : vector<4x256xi1>
    %cst_13 = arith.constant 0.000000e+00 : f32
    %49 = vector.broadcast %cst_13 : f32 to vector<4x256xf32>
    %50 = arith.select %48, %47, %49 : vector<4x256xi1>, vector<4x256xf32>
    %51 = vector.extract_strided_slice %2 {offsets = [0, 2], sizes = [4, 1], strides = [1, 1]} : vector<4x9xf32> to vector<4x1xf32>
    %52 = vector.broadcast %51 : vector<4x1xf32> to vector<4x256xf32>
    %53 = arith.mulf %52, %50 : vector<4x256xf32>
    %54 = arith.addf %46, %53 : vector<4x256xf32>
    %c1_i32_14 = arith.constant 1 : i32
    %55 = tpu.dynamic_rotate %1 by %c1_i32_14 dim 1 : vector<4x256xf32>, i32 -> vector<4x256xf32>
    %cst_15 = arith.constant 0.000000e+00 : f32
    %56 = vector.broadcast %cst_15 : f32 to vector<4x256xf32>
    %57 = arith.select %26, %55, %56 : vector<4x256xi1>, vector<4x256xf32>
    %58 = vector.extract_strided_slice %2 {offsets = [0, 3], sizes = [4, 1], strides = [1, 1]} : vector<4x9xf32> to vector<4x1xf32>
    %59 = vector.broadcast %58 : vector<4x1xf32> to vector<4x256xf32>
    %60 = arith.mulf %59, %57 : vector<4x256xf32>
    %61 = arith.addf %54, %60 : vector<4x256xf32>
    %c255_i32 = arith.constant 255 : i32
    %62 = tpu.dynamic_rotate %1 by %c255_i32 dim 1 : vector<4x256xf32>, i32 -> vector<4x256xf32>
    %cst_16 = arith.constant 0.000000e+00 : f32
    %63 = vector.broadcast %cst_16 : f32 to vector<4x256xf32>
    %64 = arith.select %28, %62, %63 : vector<4x256xi1>, vector<4x256xf32>
    %65 = vector.extract_strided_slice %2 {offsets = [0, 5], sizes = [4, 1], strides = [1, 1]} : vector<4x9xf32> to vector<4x1xf32>
    %66 = vector.broadcast %65 : vector<4x1xf32> to vector<4x256xf32>
    %67 = arith.mulf %66, %64 : vector<4x256xf32>
    %68 = arith.addf %61, %67 : vector<4x256xf32>
    %c241_i32 = arith.constant 241 : i32
    %69 = tpu.dynamic_rotate %1 by %c241_i32 dim 1 : vector<4x256xf32>, i32 -> vector<4x256xf32>
    %70 = arith.andi %24, %26 : vector<4x256xi1>
    %cst_17 = arith.constant 0.000000e+00 : f32
    %71 = vector.broadcast %cst_17 : f32 to vector<4x256xf32>
    %72 = arith.select %70, %69, %71 : vector<4x256xi1>, vector<4x256xf32>
    %73 = vector.extract_strided_slice %2 {offsets = [0, 6], sizes = [4, 1], strides = [1, 1]} : vector<4x9xf32> to vector<4x1xf32>
    %74 = vector.broadcast %73 : vector<4x1xf32> to vector<4x256xf32>
    %75 = arith.mulf %74, %72 : vector<4x256xf32>
    %76 = arith.addf %68, %75 : vector<4x256xf32>
    %c240_i32_18 = arith.constant 240 : i32
    %77 = tpu.dynamic_rotate %1 by %c240_i32_18 dim 1 : vector<4x256xf32>, i32 -> vector<4x256xf32>
    %cst_19 = arith.constant 0.000000e+00 : f32
    %78 = vector.broadcast %cst_19 : f32 to vector<4x256xf32>
    %79 = arith.select %24, %77, %78 : vector<4x256xi1>, vector<4x256xf32>
    %80 = vector.extract_strided_slice %2 {offsets = [0, 7], sizes = [4, 1], strides = [1, 1]} : vector<4x9xf32> to vector<4x1xf32>
    %81 = vector.broadcast %80 : vector<4x1xf32> to vector<4x256xf32>
    %82 = arith.mulf %81, %79 : vector<4x256xf32>
    %83 = arith.addf %76, %82 : vector<4x256xf32>
    %c239_i32 = arith.constant 239 : i32
    %84 = tpu.dynamic_rotate %1 by %c239_i32 dim 1 : vector<4x256xf32>, i32 -> vector<4x256xf32>
    %85 = arith.andi %24, %28 : vector<4x256xi1>
    %cst_20 = arith.constant 0.000000e+00 : f32
    %86 = vector.broadcast %cst_20 : f32 to vector<4x256xf32>
    %87 = arith.select %85, %84, %86 : vector<4x256xi1>, vector<4x256xf32>
    %88 = vector.extract_strided_slice %2 {offsets = [0, 8], sizes = [4, 1], strides = [1, 1]} : vector<4x9xf32> to vector<4x1xf32>
    %89 = vector.broadcast %88 : vector<4x1xf32> to vector<4x256xf32>
    %90 = arith.mulf %89, %87 : vector<4x256xf32>
    %91 = arith.addf %83, %90 : vector<4x256xf32>
    %92 = vector.broadcast %3 : vector<4x1xf32> to vector<4x256xf32>
    %93 = arith.addf %91, %92 : vector<4x256xf32>
    %94 = arith.maximumf %1, %93 : vector<4x256xf32>
    %c0_21 = arith.constant 0 : index
    %c0_22 = arith.constant 0 : index
    %c0_23 = arith.constant 0 : index
    %95 = vector.load %arg5[%c0_21, %c0_22, %c0_23] : memref<1x4x256xf32, #tpu.memory_space<vmem>>, vector<1x4x256xf32>
    %96 = vector.shape_cast %95 : vector<1x4x256xf32> to vector<4x256xf32>
    %97 = vector.shape_cast %94 : vector<4x256xf32> to vector<1x4x256xf32>
    tpu.vector_store %arg5[%c0_21, %c0_22, %c0_23], %97 {strides = array<i32>} : memref<1x4x256xf32, #tpu.memory_space<vmem>>, vector<1x4x256xf32>,
    return
  }
  func.func @transform_0(%arg0: i32, %arg1: i32) -> (i32, i32, i32) {
    %c0_i32 = arith.constant 0 : i32
    %c0_i32_0 = arith.constant 0 : i32
    return %arg0, %arg1, %c0_i32 : i32, i32, i32
  }
  func.func @transform_1(%arg0: i32, %arg1: i32) -> (i32, i32) {
    %c0_i32 = arith.constant 0 : i32
    %c0_i32_0 = arith.constant 0 : i32
    return %arg1, %c0_i32 : i32, i32
  }
  func.func @transform_2(%arg0: i32, %arg1: i32) -> (i32, i32) {
    %c0_i32 = arith.constant 0 : i32
    %c0_i32_0 = arith.constant 0 : i32
    return %arg1, %c0_i32 : i32, i32
  }
  func.func @transform_3(%arg0: i32, %arg1: i32) -> (i32, i32, i32) {
    %c0_i32 = arith.constant 0 : i32
    %c0_i32_0 = arith.constant 0 : i32
    return %arg0, %arg1, %c0_i32 : i32, i32, i32
  }
}

</mosaic_0001>

<llo_original>
// kernel: tpu_custom_call.1
$region0: #{tpu_custom_call.1}
  #allocation0 [shape = 'u32[]', space=smem, size = 0x4, offset = 0x4, fixed_abs, tag = 'smem constant byte address 0x4 - core index']
  #allocation1 [shape = 'u32[72,128]{1,0:T(1,128)}', space=vmem, size = 0x9000, scoped, tag = 'internal scratch']
  %s0 = inlined_call_operand.hbm [shape: f32[2,4,256], index: 0, kind: input, shape index: {}]
  %s1 = inlined_call_operand.vmem [shape: f32[4,9], index: 1, kind: input, shape index: {}]
  %s2 = inlined_call_operand.vmem [shape: f32[4,1], index: 2, kind: input, shape index: {}]
  %s3 = inlined_call_operand.hbm [shape: f32[2,4,256], index: 3, kind: output, shape index: {}]
  %s4 = sld [smem:[#allocation0]]
  $region49: #{tpu_custom_call.1} parent=0
    _
  %s6 = ssub.s32 1, %s4
  %s7 = scalar_select 0, %s6, %s4
  $region1: #{tpu_custom_call.1} parent=0
    #allocation2 [shape = 'u8[8192]{0}', space=vmem, size = 0x2000, scoped, tag = 'input window, operand 0']
    #allocation3 [shape = 's32[2]{0}', space=sflag, size = 0x8, scoped, tag = 'scoped memory for tpu_custom_call.1']
    #allocation4 [shape = 's32[2]{0}', space=sflag, size = 0x8, scoped, tag = 'scoped memory for tpu_custom_call.1']
    #allocation5 [shape = 'u8[8192]{0}', space=vmem, size = 0x2000, scoped, tag = 'output window, operand 0']
    %8 = vsyncpa [#allocation3], 0
    %s9 = scalar_lea.sflag [#allocation3], 1
    %10 = vsyncpa %s9, 0
    %11 = vsyncpa [#allocation4], 0
    %s12 = scalar_lea.sflag [#allocation4], 1
    %13 = vsyncpa %s12, 0
    loop: start=0, step=1, limit=4
    $region2: #{tpu_custom_call.1} parent=1 // loop_pre_header
      _
    $region3: #{tpu_custom_call.1} parent=1 // loop_header
      %s15 = sphi 0, %s19
      %p16 = scmp.ge.s32.totalorder %s15, 4
      %s22 = sphi 0, %s34
      %s23 = sphi 0, %s30
      %s24 = sphi 0, %s22
      %s25 = sphi 0, %s23
      %s26 = sphi 0, %s24
      %s27 = sphi 0, %s25
      %s39 = sphi 0, %s41
      %s42 = sphi 0, %s39
      %s43 = sphi 0, %s42
      %s59 = sphi 0, %s43
      %s65 = sphi 0, %s67
      %s68 = sphi 0, %s65
      %s69 = sphi 0, %s68
      %s85 = sphi 0, %s69
      %s91 = sphi 0, %s93
      %s94 = sphi 0, %s91
      %s95 = sphi 0, %s94
      %s111 = sphi 0, %s95
      %s119 = sphi 0, %s121
      %s122 = sphi 0, %s119
      %s123 = sphi 0, %s122
      %s139 = sphi 0, %s123
    $region4: #{tpu_custom_call.1} parent=1 // loop_header_branch
      %18 = sbr.rel (%p16) target = $region8
    $region5: #{tpu_custom_call.1} parent=1 // loop_body
      %s20 = ssub.s32 %s15, 1
      %s21 = ssub.s32 %s15, 2
      %s28 = sadd.s32 1, %s23
      %p29 = scmp.ge.s32.totalorder %s28, 1
      %s30 = scalar_select %p29, 0, %s28
      %s31 = sadd.s32 1, %s22
      %s32 = scalar_select %p29, %s31, %s22
      %p33 = scmp.ge.s32.totalorder %s32, 2
      %s34 = scalar_select %p33, 0, %s32
      %s35 = ssub.s32 %s22, %s34
      %s36 = ssub.s32 %s23, %s30
      %s37 = sor.u32 %s35, %s36
      %p38 = scmp.eq.s32.totalorder %s37, 0
      %s40 = sadd.s32 %s39, 1
      %s41 = scalar_select %p38, %s39, %s40
      %p44 = pneg %p38
      %p45 = scmp.eq.s32.totalorder %s15, 1
      %p46 = por %p44, %p45
      %p47 = scmp.ne.s32.totalorder %s39, %s42
      %p48 = scmp.eq.s32.totalorder %s15, 0
      %p49 = por %p47, %p48
      %p50 = scmp.ne.s32.totalorder %s39, %s42
      %p51 = scmp.eq.s32.totalorder %s20, 1
      %p52 = por %p50, %p51
      %p53 = scmp.ne.s32.totalorder %s42, %s43
      %p54 = scmp.eq.s32.totalorder %s20, 0
      %p55 = por %p53, %p54
      %p56 = scmp.ne.s32.totalorder %s42, %s43
      %p57 = scmp.eq.s32.totalorder %s21, 1
      %p58 = por %p56, %p57
      %p60 = scmp.ne.s32.totalorder %s43, %s59
      %p61 = scmp.eq.s32.totalorder %s21, 0
      %p62 = por %p60, %p61
      %s63 = ssub.s32 %s23, %s30
      %p64 = scmp.eq.s32.totalorder %s63, 0
      %s66 = sadd.s32 %s65, 1
      %s67 = scalar_select %p64, %s65, %s66
      %p70 = pneg %p64
      %p71 = scmp.eq.s32.totalorder %s15, 1
      %p72 = por %p70, %p71
      %p73 = scmp.ne.s32.totalorder %s65, %s68
      %p74 = scmp.eq.s32.totalorder %s15, 0
      %p75 = por %p73, %p74
      %p76 = scmp.ne.s32.totalorder %s65, %s68
      %p77 = scmp.eq.s32.totalorder %s20, 1
      %p78 = por %p76, %p77
      %p79 = scmp.ne.s32.totalorder %s68, %s69
      %p80 = scmp.eq.s32.totalorder %s20, 0
      %p81 = por %p79, %p80
      %p82 = scmp.ne.s32.totalorder %s68, %s69
      %p83 = scmp.eq.s32.totalorder %s21, 1
      %p84 = por %p82, %p83
      %p86 = scmp.ne.s32.totalorder %s69, %s85
      %p87 = scmp.eq.s32.totalorder %s21, 0
      %p88 = por %p86, %p87
      %s89 = ssub.s32 %s23, %s30
      %p90 = scmp.eq.s32.totalorder %s89, 0
      %s92 = sadd.s32 %s91, 1
      %s93 = scalar_select %p90, %s91, %s92
      %p96 = pneg %p90
      %p97 = scmp.eq.s32.totalorder %s15, 1
      %p98 = por %p96, %p97
      %p99 = scmp.ne.s32.totalorder %s91, %s94
      %p100 = scmp.eq.s32.totalorder %s15, 0
      %p101 = por %p99, %p100
      %p102 = scmp.ne.s32.totalorder %s91, %s94
      %p103 = scmp.eq.s32.totalorder %s20, 1
      %p104 = por %p102, %p103
      %p105 = scmp.ne.s32.totalorder %s94, %s95
      %p106 = scmp.eq.s32.totalorder %s20, 0
      %p107 = por %p105, %p106
      %p108 = scmp.ne.s32.totalorder %s94, %s95
      %p109 = scmp.eq.s32.totalorder %s21, 1
      %p110 = por %p108, %p109
      %p112 = scmp.ne.s32.totalorder %s95, %s111
      %p113 = scmp.eq.s32.totalorder %s21, 0
      %p114 = por %p112, %p113
      %s115 = ssub.s32 %s22, %s34
      %s116 = ssub.s32 %s23, %s30
      %s117 = sor.u32 %s115, %s116
      %p118 = scmp.eq.s32.totalorder %s117, 0
      %s120 = sadd.s32 %s119, 1
      %s121 = scalar_select %p118, %s119, %s120
      %p124 = pneg %p118
      %p125 = scmp.eq.s32.totalorder %s15, 1
      %p126 = por %p124, %p125
      %p127 = scmp.ne.s32.totalorder %s119, %s122
      %p128 = scmp.eq.s32.totalorder %s15, 0
      %p129 = por %p127, %p128
      %p130 = scmp.ne.s32.totalorder %s119, %s122
      %p131 = scmp.eq.s32.totalorder %s20, 1
      %p132 = por %p130, %p131
      %p133 = scmp.ne.s32.totalorder %s122, %s123
      %p134 = scmp.eq.s32.totalorder %s20, 0
      %p135 = por %p133, %p134
      %p136 = scmp.ne.s32.totalorder %s122, %s123
      %p137 = scmp.eq.s32.totalorder %s21, 1
      %p138 = por %p136, %p137
      %p140 = scmp.ne.s32.totalorder %s123, %s139
      %p141 = scmp.eq.s32.totalorder %s21, 0
      %p142 = por %p140, %p141
      %p143 = scmp.le.s32.totalorder 1, %s15
      %p144 = scmp.lt.s32.totalorder %s15, 3
      %p145 = pnand %p143, %p144
      %p146 = pneg %p145
      // Predicated region
      $region9: #{tpu_custom_call.1} parent=5 // pred_check
        _
      $region10: #{tpu_custom_call.1} parent=5 // pred_check_branch
        %148 = sbr.rel (%p145) target = $region12
      $region11: #{tpu_custom_call.1} parent=5 // pred_region
        %s149 = ssub.s32 %s15, 1
        // Predicated region
        $region13: #{tpu_custom_call.1} parent=11 // pred_check
          %p150 = pneg %p81
        $region14: #{tpu_custom_call.1} parent=11 // pred_check_branch
          %152 = sbr.rel (%p150) target = $region16
        $region15: #{tpu_custom_call.1} parent=11 // pred_region
          %p153 = scmp.lt.s32.totalorder %s25, 0
          %s154 = scalar_select %p153, %s25, 0
          %s155 = smul.addr %s154, 4
          %s156 = scalar_lea.vmem %s1, %s155
        $region16: #{tpu_custom_call.1} parent=11 // pred_fallthru
          _
        // Predicated region
        $region17: #{tpu_custom_call.1} parent=11 // pred_check
          %p157 = pneg %p107
        $region18: #{tpu_custom_call.1} parent=11 // pred_check_branch
          %159 = sbr.rel (%p157) target = $region20
        $region19: #{tpu_custom_call.1} parent=11 // pred_region
          %p160 = scmp.lt.s32.totalorder %s25, 0
          %s161 = scalar_select %p160, %s25, 0
          %s162 = smul.addr %s161, 4
          %s163 = scalar_lea.vmem %s2, %s162
        $region20: #{tpu_custom_call.1} parent=11 // pred_fallthru
          _
      $region12: #{tpu_custom_call.1} parent=5 // pred_fallthru
        _
      %p164 = scmp.lt.s32.totalorder %s15, 2
      // Predicated region
      $region21: #{tpu_custom_call.1} parent=5 // pred_check
        %p165 = pneg %p164
      $region22: #{tpu_custom_call.1} parent=5 // pred_check_branch
        %167 = sbr.rel (%p165) target = $region24
      $region23: #{tpu_custom_call.1} parent=5 // pred_region
        // Predicated region
        $region25: #{tpu_custom_call.1} parent=23 // pred_check
          %p168 = pneg %p49
        $region26: #{tpu_custom_call.1} parent=23 // pred_check_branch
          %170 = sbr.rel (%p168) target = $region28
        $region27: #{tpu_custom_call.1} parent=23 // pred_region
          %s171 = sand.u32 %s39, 1
          %s172 = scalar_lea.sflag [#allocation3], %s171
          %s173 = sand.u32 %s39, 1
          %s174 = smul.addr %s173, 8
          %s175 = scalar_lea.vmem [#allocation2], %s174
          %177 = vsyncadd %s172, 0
          %s178 = smul.addr %s23, 2
          %s179 = smul.addr %s22, 2
          %s180 = sadd.s32 %s178, %s179
          %s181 = smul.addr %s180, 4
          %s182 = scalar_lea.hbm %s0, %s181
          %s184 = sshll.u32 %s182, 4
          %s185 = int_to_ptr.hbm [resolvable:$true] %s184
          %s186 = sshll.u32 %s175, 4
          %s187 = int_to_ptr.vmem [resolvable:$true] %s186
          %189 = dma.hbm_to_vmem [thread:$0]  %s185, 128, %s187, %s172
        $region28: #{tpu_custom_call.1} parent=23 // pred_fallthru
          _
      $region24: #{tpu_custom_call.1} parent=5 // pred_fallthru
        _
      %p190 = scmp.le.s32.totalorder 1, %s15
      %p191 = scmp.lt.s32.totalorder %s15, 3
      %p192 = pnand %p190, %p191
      %p193 = pneg %p192
      // Predicated region
      $region29: #{tpu_custom_call.1} parent=5 // pred_check
        _
      $region30: #{tpu_custom_call.1} parent=5 // pred_check_branch
        %195 = sbr.rel (%p192) target = $region32
      $region31: #{tpu_custom_call.1} parent=5 // pred_region
        %s196 = ssub.s32 %s15, 1
        %s197 = sand.u32 %s42, 1
        %s198 = scalar_lea.sflag [#allocation3], %s197
        %s199 = sand.u32 %s42, 1
        %s200 = smul.addr %s199, 8
        %s201 = scalar_lea.vmem [#allocation2], %s200
        // Predicated region
        $region33: #{tpu_custom_call.1} parent=31 // pred_check
          %p202 = pneg %p55
        $region34: #{tpu_custom_call.1} parent=31 // pred_check_branch
          %204 = sbr.rel (%p202) target = $region36
        $region35: #{tpu_custom_call.1} parent=31 // pred_region
          %206 = dma.done %s198, 128
        $region36: #{tpu_custom_call.1} parent=31 // pred_fallthru
          _
        %s207 = sand.u32 %s42, 1
        %s208 = scalar_lea.sflag [#allocation3], %s207
        %s209 = sand.u32 %s42, 1
        %s210 = smul.addr %s209, 8
        %s211 = scalar_lea.vmem [#allocation2], %s210
        %p212 = pneg %p55
        %p213 = pneg %p52
        %p214 = scmp.lt.s32.totalorder %s25, 0
        %s215 = scalar_select %p214, %s25, 0
        %s216 = smul.addr %s215, 4
        %s217 = scalar_lea.vmem %s1, %s216
        %p218 = pneg %p81
        %p219 = pneg %p78
        %p220 = scmp.lt.s32.totalorder %s25, 0
        %s221 = scalar_select %p220, %s25, 0
        %s222 = smul.addr %s221, 4
        %s223 = scalar_lea.vmem %s2, %s222
        %p224 = pneg %p107
        %p225 = pneg %p104
        %p226 = pneg %p135
        %p227 = pneg %p132
        %s228 = sand.u32 %s122, 1
        %s229 = scalar_lea.sflag [#allocation4], %s228
        %s230 = sand.u32 %s122, 1
        %s231 = smul.addr %s230, 8
        %s232 = scalar_lea.vmem [#allocation5], %s231
        %p233 = scmp.lt.s32.totalorder %s25, 0
        %s234 = scalar_select %p233, %s25, 0
        %s235 = smul.addr %s234, 4
        %s236 = scalar_lea.vmem %s1, %s235
        %p237 = scmp.lt.s32.totalorder %s25, 0
        %s238 = scalar_select %p237, %s25, 0
        %s239 = smul.addr %s238, 4
        %s240 = scalar_lea.vmem %s2, %s239
        %v241 = vld [vmem:[%s201] sm:$0xff]
        %v242 = vld [vmem:[%s236] sm:$0xf]
        %v243 = vld [vmem:[%s240] sm:$0xf]
        %v244 = vlaneseq
        %v245 = vand.u32 %v244, 127
        %v246 = vadd.s32 %v245, 128
        %vm247 = vcmp.lt.s32.totalorder %v245, 0
        %v248 = vsub.s32 0, %v245
        %v249 = vsel %vm247, %v248, %v245
        %v250 = vshrl.u32 %v249, 4
        %v251 = vand.u32 %v249, 15
        %v252 = vsub.s32 0, %v251
        %v253 = vsel %vm247, %v252, %v251
        %vm254 = vcmp.lt.s32.totalorder %v246, 0
        %v255 = vsub.s32 0, %v246
        %v256 = vsel %vm254, %v255, %v246
        %v257 = vshrl.u32 %v256, 4
        %v258 = vand.u32 %v256, 15
        %v259 = vsub.s32 0, %v258
        %v260 = vsel %vm254, %v259, %v258
        %vm261 = vcmp.ne.s32.totalorder %v253, 0
        %vm262 = vcmp.ne.s32.totalorder %v260, 0
        %vm263 = vcmp.lt.s32.totalorder %v253, 0
        %vm264 = vcmp.lt.s32.totalorder %v260, 0
        %vm265 = vmand %vm263, %vm261
        %vm266 = vmand %vm264, %vm262
        %v267 = vadd.s32 %v253, 16
        %v268 = vadd.s32 %v260, 16
        %v269 = vsel %vm265, %v267, %v253
        %v270 = vsel %vm266, %v268, %v260
        %vm271 = vcmp.ge.s32.totalorder %v245, 16
        %vm272 = vcmp.ge.s32.totalorder %v246, 16
        %vm273 = vcmp.lt.s32.totalorder %v245, 240
        %vm274 = vcmp.lt.s32.totalorder %v246, 240
        %vm275 = vcmp.ge.s32.totalorder %v269, 1
        %vm276 = vcmp.ge.s32.totalorder %v270, 1
        %vm277 = vcmp.le.s32.totalorder %v269, 14
        %vm278 = vcmp.le.s32.totalorder %v270, 14
        %280 = vset.pattern.permute.xlu0 4
        %281 = vperm.xlu0 %280, %v242
        %v282 = vpop.permute.xlu0 %281
        %285 = vst [vmem:[#allocation1] ss:$2 sm:$0xff] %v241
        %v286 = vld.sshfl [vmem:[#allocation1] sm:$0xff pattern:$0x75316420]
        %v287 = vld.sshfl [vmem:[#allocation1 + $0x8] sm:$0xff pattern:$0x75316420]
        %v290 = vmul.f32 %v282, %v286
        %v291 = vmul.f32 %v282, %v287
        %292 = vst [vmem:[#allocation1] ss:$2 sm:$0xff] %v241
        %v293 = vld.sshfl [vmem:[#allocation1] sm:$0xff pattern:$0x75316420]
        %v294 = vld.sshfl [vmem:[#allocation1 + $0x8] sm:$0xff pattern:$0x75316420]
        %297 = vrot.lane.b32.xlu0 %v293, 17
        %v298 = vpop.permute.xlu0 %297
        %299 = vrot.lane.b32.xlu0 %v294, 17
        %v300 = vpop.permute.xlu0 %299
        %vm301 = vcmp.lt.s32.totalorder %v245, 17
        %v302 = vsel %vm301, %v298, %v300
        %v303 = vsel %vm301, %v300, %v298
        %vm304 = vmand %vm271, %vm275
        %vm305 = vmand %vm272, %vm276
        %v306 = vsel %vm304, %v303, 0.0
        %v307 = vsel %vm305, %v302, 0.0
        %308 = vset.pattern.permute.xlu0 0
        %309 = vperm.xlu0 %308, %v242
        %v310 = vpop.permute.xlu0 %309
        %v312 = vmul.f32 %v310, %v306
        %v313 = vmul.f32 %v310, %v307
        %v314 = vadd.f32 %v290, %v312
        %v315 = vadd.f32 %v291, %v313
        %316 = vst [vmem:[#allocation1] ss:$2 sm:$0xff] %v241
        %v317 = vld.sshfl [vmem:[#allocation1] sm:$0xff pattern:$0x75316420]
        %v318 = vld.sshfl [vmem:[#allocation1 + $0x8] sm:$0xff pattern:$0x75316420]
        %321 = vrot.lane.b32.xlu0 %v317, 16
        %v322 = vpop.permute.xlu0 %321
        %323 = vrot.lane.b32.xlu0 %v318, 16
        %v324 = vpop.permute.xlu0 %323
        %vm325 = vcmp.lt.s32.totalorder %v245, 16
        %v326 = vsel %vm325, %v322, %v324
        %v327 = vsel %vm325, %v324, %v322
        %v328 = vsel %vm271, %v327, 0.0
        %v329 = vsel %vm272, %v326, 0.0
        %330 = vset.pattern.permute.xlu0 1
        %331 = vperm.xlu0 %330, %v242
        %v332 = vpop.permute.xlu0 %331
        %v334 = vmul.f32 %v332, %v328
        %v335 = vmul.f32 %v332, %v329
        %v336 = vadd.f32 %v314, %v334
        %v337 = vadd.f32 %v315, %v335
        %338 = vst [vmem:[#allocation1] ss:$2 sm:$0xff] %v241
        %v339 = vld.sshfl [vmem:[#allocation1] sm:$0xff pattern:$0x75316420]
        %v340 = vld.sshfl [vmem:[#allocation1 + $0x8] sm:$0xff pattern:$0x75316420]
        %343 = vrot.lane.b32.xlu0 %v339, 15
        %v344 = vpop.permute.xlu0 %343
        %345 = vrot.lane.b32.xlu0 %v340, 15
        %v346 = vpop.permute.xlu0 %345
        %vm347 = vcmp.lt.s32.totalorder %v245, 15
        %v348 = vsel %vm347, %v344, %v346
        %v349 = vsel %vm347, %v346, %v344
        %vm350 = vmand %vm271, %vm277
        %vm351 = vmand %vm272, %vm278
        %v352 = vsel %vm350, %v349, 0.0
        %v353 = vsel %vm351, %v348, 0.0
        %354 = vset.pattern.permute.xlu0 2
        %355 = vperm.xlu0 %354, %v242
        %v356 = vpop.permute.xlu0 %355
        %v358 = vmul.f32 %v356, %v352
        %v359 = vmul.f32 %v356, %v353
        %v360 = vadd.f32 %v336, %v358
        %v361 = vadd.f32 %v337, %v359
        %362 = vst [vmem:[#allocation1] ss:$2 sm:$0xff] %v241
        %v363 = vld.sshfl [vmem:[#allocation1] sm:$0xff pattern:$0x75316420]
        %v364 = vld.sshfl [vmem:[#allocation1 + $0x8] sm:$0xff pattern:$0x75316420]
        %367 = vrot.lane.b32.xlu0 %v363, 1
        %v368 = vpop.permute.xlu0 %367
        %369 = vrot.lane.b32.xlu0 %v364, 1
        %v370 = vpop.permute.xlu0 %369
        %vm371 = vcmp.lt.s32.totalorder %v245, 1
        %v372 = vsel %vm371, %v368, %v370
        %v373 = vsel %vm371, %v370, %v368
        %v374 = vsel %vm275, %v373, 0.0
        %v375 = vsel %vm276, %v372, 0.0
        %376 = vset.pattern.permute.xlu0 3
        %377 = vperm.xlu0 %376, %v242
        %v378 = vpop.permute.xlu0 %377
        %v380 = vmul.f32 %v378, %v374
        %v381 = vmul.f32 %v378, %v375
        %v382 = vadd.f32 %v360, %v380
        %v383 = vadd.f32 %v361, %v381
        %384 = vst [vmem:[#allocation1] ss:$2 sm:$0xff] %v241
        %v385 = vld.sshfl [vmem:[#allocation1] sm:$0xff pattern:$0x75316420]
        %v386 = vld.sshfl [vmem:[#allocation1 + $0x8] sm:$0xff pattern:$0x75316420]
        %389 = vrot.lane.b32.xlu0 %v385, 127
        %v390 = vpop.permute.xlu0 %389
        %391 = vrot.lane.b32.xlu0 %v386, 127
        %v392 = vpop.permute.xlu0 %391
        %vm393 = vcmp.lt.s32.totalorder %v245, 127
        %v394 = vsel %vm393, %v390, %v392
        %v395 = vsel %vm393, %v392, %v390
        %v396 = vsel %vm277, %v394, 0.0
        %v397 = vsel %vm278, %v395, 0.0
        %398 = vset.pattern.permute.xlu0 5
        %399 = vperm.xlu0 %398, %v242
        %v400 = vpop.permute.xlu0 %399
        %v402 = vmul.f32 %v400, %v396
        %v403 = vmul.f32 %v400, %v397
        %v404 = vadd.f32 %v382, %v402
        %v405 = vadd.f32 %v383, %v403
        %406 = vst [vmem:[#allocation1] ss:$2 sm:$0xff] %v241
        %v407 = vld.sshfl [vmem:[#allocation1] sm:$0xff pattern:$0x75316420]
        %v408 = vld.sshfl [vmem:[#allocation1 + $0x8] sm:$0xff pattern:$0x75316420]
        %411 = vrot.lane.b32.xlu0 %v407, 113
        %v412 = vpop.permute.xlu0 %411
        %413 = vrot.lane.b32.xlu0 %v408, 113
        %v414 = vpop.permute.xlu0 %413
        %vm415 = vcmp.lt.s32.totalorder %v245, 113
        %v416 = vsel %vm415, %v412, %v414
        %v417 = vsel %vm415, %v414, %v412
        %vm418 = vmand %vm273, %vm275
        %vm419 = vmand %vm274, %vm276
        %v420 = vsel %vm418, %v416, 0.0
        %v421 = vsel %vm419, %v417, 0.0
        %422 = vset.pattern.permute.xlu0 6
        %423 = vperm.xlu0 %422, %v242
        %v424 = vpop.permute.xlu0 %423
        %v426 = vmul.f32 %v424, %v420
        %v427 = vmul.f32 %v424, %v421
        %v428 = vadd.f32 %v404, %v426
        %v429 = vadd.f32 %v405, %v427
        %430 = vst [vmem:[#allocation1] ss:$2 sm:$0xff] %v241
        %v431 = vld.sshfl [vmem:[#allocation1] sm:$0xff pattern:$0x75316420]
        %v432 = vld.sshfl [vmem:[#allocation1 + $0x8] sm:$0xff pattern:$0x75316420]
        %435 = vrot.lane.b32.xlu0 %v431, 112
        %v436 = vpop.permute.xlu0 %435
        %437 = vrot.lane.b32.xlu0 %v432, 112
        %v438 = vpop.permute.xlu0 %437
        %vm439 = vcmp.lt.s32.totalorder %v245, 112
        %v440 = vsel %vm439, %v436, %v438
        %v441 = vsel %vm439, %v438, %v436
        %v442 = vsel %vm273, %v440, 0.0
        %v443 = vsel %vm274, %v441, 0.0
        %444 = vset.pattern.permute.xlu0 7
        %445 = vperm.xlu0 %444, %v242
        %v446 = vpop.permute.xlu0 %445
        %v448 = vmul.f32 %v446, %v442
        %v449 = vmul.f32 %v446, %v443
        %v450 = vadd.f32 %v428, %v448
        %v451 = vadd.f32 %v429, %v449
        %452 = vst [vmem:[#allocation1] ss:$2 sm:$0xff] %v241
        %v453 = vld.sshfl [vmem:[#allocation1] sm:$0xff pattern:$0x75316420]
        %v454 = vld.sshfl [vmem:[#allocation1 + $0x8] sm:$0xff pattern:$0x75316420]
        %457 = vrot.lane.b32.xlu0 %v453, 111
        %v458 = vpop.permute.xlu0 %457
        %459 = vrot.lane.b32.xlu0 %v454, 111
        %v460 = vpop.permute.xlu0 %459
        %vm461 = vcmp.lt.s32.totalorder %v245, 111
        %v462 = vsel %vm461, %v458, %v460
        %v463 = vsel %vm461, %v460, %v458
        %vm464 = vmand %vm273, %vm277
        %vm465 = vmand %vm274, %vm278
        %v466 = vsel %vm464, %v462, 0.0
        %v467 = vsel %vm465, %v463, 0.0
        %468 = vset.pattern.permute.xlu0 8
        %469 = vperm.xlu0 %468, %v242
        %v470 = vpop.permute.xlu0 %469
        %v472 = vmul.f32 %v470, %v466
        %v473 = vmul.f32 %v470, %v467
        %v474 = vadd.f32 %v450, %v472
        %v475 = vadd.f32 %v451, %v473
        %477 = vset.pattern.permute.xlu0 0
        %478 = vperm.xlu0 %477, %v243
        %v479 = vpop.permute.xlu0 %478
        %v481 = vadd.f32 %v474, %v479
        %v482 = vadd.f32 %v475, %v479
        %v485 = vrot.slane %v482, 4
        %vm486 = vcmask 1043456
        %v487 = vsel %vm486, %v481, %v485
        %v489 = vmax.f32 %v241, %v487
        %490 = vst [vmem:[%s232] sm:$0xff] %v489
        %s491 = sand.u32 %s122, 1
        %s492 = scalar_lea.sflag [#allocation4], %s491
        %s493 = sand.u32 %s122, 1
        %s494 = smul.addr %s493, 8
        %s495 = scalar_lea.vmem [#allocation5], %s494
        // Predicated region
        $region37: #{tpu_custom_call.1} parent=31 // pred_check
          %p496 = pneg %p132
        $region38: #{tpu_custom_call.1} parent=31 // pred_check_branch
          %498 = sbr.rel (%p496) target = $region40
        $region39: #{tpu_custom_call.1} parent=31 // pred_region
          %500 = vsyncadd %s492, 0
          %s501 = smul.addr %s25, 2
          %s502 = smul.addr %s24, 2
          %s503 = sadd.s32 %s501, %s502
          %s504 = smul.addr %s503, 4
          %s505 = scalar_lea.hbm %s3, %s504
          %s507 = sshll.u32 %s495, 4
          %s508 = int_to_ptr.vmem [resolvable:$true] %s507
          %s509 = sshll.u32 %s505, 4
          %s510 = int_to_ptr.hbm [resolvable:$true] %s509
          %512 = dma.vmem_to_hbm [thread:$0]  %s508, 128, %s510, %s492
        $region40: #{tpu_custom_call.1} parent=31 // pred_fallthru
          _
      $region32: #{tpu_custom_call.1} parent=5 // pred_fallthru
        _
      %p513 = scmp.le.s32.totalorder 2, %s15
      // Predicated region
      $region41: #{tpu_custom_call.1} parent=5 // pred_check
        %p514 = pneg %p513
      $region42: #{tpu_custom_call.1} parent=5 // pred_check_branch
        %516 = sbr.rel (%p514) target = $region44
      $region43: #{tpu_custom_call.1} parent=5 // pred_region
        %s517 = ssub.s32 %s15, 2
        // Predicated region
        $region45: #{tpu_custom_call.1} parent=43 // pred_check
          %p518 = pneg %p138
        $region46: #{tpu_custom_call.1} parent=43 // pred_check_branch
          %520 = sbr.rel (%p518) target = $region48
        $region47: #{tpu_custom_call.1} parent=43 // pred_region
          %s521 = sand.u32 %s123, 1
          %s522 = scalar_lea.sflag [#allocation4], %s521
          %s523 = sand.u32 %s123, 1
          %s524 = smul.addr %s523, 8
          %s525 = scalar_lea.vmem [#allocation5], %s524
          %527 = dma.done %s522, 128
        $region48: #{tpu_custom_call.1} parent=43 // pred_fallthru
          _
      $region44: #{tpu_custom_call.1} parent=5 // pred_fallthru
        _
    $region6: #{tpu_custom_call.1} parent=1 // loop_footer
      %s19 = sadd.s32 1, %s15
    $region7: #{tpu_custom_call.1} parent=1 // loop_footer_branch
      %14 = sbr.rel target = $region3
    $region8: #{tpu_custom_call.1} parent=1 // loop_exit
      _
    %528 = vsyncpa [#allocation3], 1
    %s529 = scalar_lea.sflag [#allocation3], 1
    %530 = vsyncpa %s529, 1
    %531 = vsyncpa [#allocation4], 1
    %s532 = scalar_lea.sflag [#allocation4], 1
    %533 = vsyncpa %s532, 1

</llo_original>
